<compile_context>
chip_gen: v6e
topology: v6e:2x2x1
jax: 0.10.0
libtpu: 0.0.40
codegen_flags: <defaults>
</compile_context>

<pallas_src>
import functools

import jax
import jax.numpy as jnp
from jax import lax
from jax.experimental import pallas as pl
from jax.experimental.pallas import tpu as pltpu

# MXU operand dtype.  jnp.float32 keeps tight parity with the f32 reference;
# set to jnp.bfloat16 on v6e/v7x for ~2x MXU rate (softmax statistics and all
# accumulation stay in f32 either way; keep f32 on v5e - no bf16 VPU/EUP).
MATMUL_DTYPE = jnp.float32

CONV_TILE_N_TARGET = 512    # lane tile for the fused 1x1 convs
ATTN_TILE_J_TARGET = 256    # key-axis tile for the attention reduction


def _pick_tile(n, target):
    """Largest divisor of n that is <= target, preferring multiples of 128."""
    target = min(n, target)
    best = None
    for t in range(target, 0, -1):
        if n % t == 0:
            if t % 128 == 0:
                return t
            if best is None:
                best = t
    return best


# ---------------------------------------------------------------------------
# Kernel 1: fused phi / theta / g 1x1 convolutions (x read once)
# ---------------------------------------------------------------------------

def _qkv_kernel(w_ref, x_ref, phi_ref, theta_ref, g_ref, *, inter):
    # w_ref: (3*inter, C), x_ref: (1, C, T)
    x = x_ref[0].astype(MATMUL_DTYPE)
    w = w_ref[...].astype(MATMUL_DTYPE)
    qkv = jnp.dot(w, x, preferred_element_type=jnp.float32)   # (3*inter, T)
    phi_ref[0] = qkv[:inter]
    theta_ref[0] = qkv[inter:2 * inter]
    g_ref[0] = qkv[2 * inter:]


def qkv_conv1x1(w_qkv, x_flat, inter, tile_n):
    """Fused 1x1 convs: (B, C, N) -> 3 x (B, inter, N)."""
    b, c, n = x_flat.shape
    out = jax.ShapeDtypeStruct((b, inter, n), jnp.float32)
    flops = 2 * b * n * (3 * inter) * c
    bytes_accessed = 4 * (b * c * n + 3 * inter * c + 3 * b * inter * n)
    return pl.pallas_call(
        functools.partial(_qkv_kernel, inter=inter),
        out_shape=(out, out, out),
        grid=(b, n // tile_n),
        in_specs=[
            pl.BlockSpec((3 * inter, c), lambda i, j: (0, 0)),
            pl.BlockSpec((1, c, tile_n), lambda i, j: (i, 0, j)),
        ],
        out_specs=(
            pl.BlockSpec((1, inter, tile_n), lambda i, j: (i, 0, j)),
            pl.BlockSpec((1, inter, tile_n), lambda i, j: (i, 0, j)),
            pl.BlockSpec((1, inter, tile_n), lambda i, j: (i, 0, j)),
        ),
        compiler_params=pltpu.CompilerParams(
            dimension_semantics=("parallel", "parallel")),
        cost_estimate=pl.CostEstimate(
            flops=flops, transcendentals=0, bytes_accessed=bytes_accessed),
    )(w_qkv, x_flat)


# ---------------------------------------------------------------------------
# Kernel 2: key-tiled attention + fused conv_mask + residual
# ---------------------------------------------------------------------------

def _attn_kernel(theta_ref, phi_ref, g_ref, we_ref, wo_ref, x_ref, o_ref,
                 acc_ref, *, m):
    j = pl.program_id(1)

    @pl.when(j == 0)
    def _():
        acc_ref[...] = jnp.zeros_like(acc_ref)

    theta = theta_ref[0].astype(MATMUL_DTYPE)      # (C, M)   query, resident
    phi_t = phi_ref[0].astype(MATMUL_DTYPE)        # (C, Tj)  key tile
    g_t = g_ref[0].astype(MATMUL_DTYPE)            # (C, Tj)  value tile

    # scores for this key tile: S[i, j] = sum_ch theta[ch, i] * phi[ch, j]
    # == (x_theta @ x_phi) of the module, permute folded into contraction dims.
    s = lax.dot_general(theta, phi_t,
                        dimension_numbers=(((0,), (0,)), ((), ())),
                        preferred_element_type=jnp.float32)     # (M, Tj)

    # torch Softmax(dim=1) on (B, M, M): per-column normalization over the
    # query axis (axis 0 here).  Each key tile holds complete columns, so the
    # softmax is exact inside the tile.  All statistics in f32.
    s = s - jnp.max(s, axis=0, keepdims=True)
    e = jnp.exp(s)
    denom = jnp.sum(e, axis=0, keepdims=True)                   # (1, Tj)
    a = e * pl.reciprocal(denom, approx=True)                   # (M, Tj)

    # accumulate Y^T directly in (C, M) layout:
    #   acc[ch, i] += sum_j g[ch, j] * a[i, j]
    acc_ref[...] += lax.dot_general(
        g_t, a.astype(MATMUL_DTYPE),
        dimension_numbers=(((1,), (1,)), ((), ())),
        preferred_element_type=jnp.float32)                     # (C, M)

    # last key tile: fused conv_mask (even/odd expanded weights reproduce the
    # module's (C, M) -> (inter, N) re-view) + residual add.
    @pl.when(j == pl.num_programs(1) - 1)
    def _():
        y = acc_ref[...].astype(MATMUL_DTYPE)                   # (C, M)
        mask_lo = jnp.dot(we_ref[...].astype(MATMUL_DTYPE), y,
                          preferred_element_type=jnp.float32)   # (C, M)
        mask_hi = jnp.dot(wo_ref[...].astype(MATMUL_DTYPE), y,
                          preferred_element_type=jnp.float32)   # (C, M)
        o_ref[0, :, :m] = mask_lo + x_ref[0, :, :m]
        o_ref[0, :, m:] = mask_hi + x_ref[0, :, m:]


def apnb_attention_mask(theta_cm, phi_cm, g_cm, w_even, w_odd, x_flat, tile_j):
    b, c, m = theta_cm.shape
    n = x_flat.shape[2]
    flops = b * (4 * m * m * c + 4 * c * c * m)
    bytes_accessed = 4 * (3 * b * c * m + 2 * c * c + 2 * b * c * n)
    return pl.pallas_call(
        functools.partial(_attn_kernel, m=m),
        out_shape=jax.ShapeDtypeStruct((b, c, n), jnp.float32),
        grid=(b, m // tile_j),
        in_specs=[
            pl.BlockSpec((1, c, m), lambda i, j: (i, 0, 0)),       # theta
            pl.BlockSpec((1, c, tile_j), lambda i, j: (i, 0, j)),  # phi tile
            pl.BlockSpec((1, c, tile_j), lambda i, j: (i, 0, j)),  # g tile
            pl.BlockSpec((c, c), lambda i, j: (0, 0)),             # w_mask even
            pl.BlockSpec((c, c), lambda i, j: (0, 0)),             # w_mask odd
            pl.BlockSpec((1, c, n), lambda i, j: (i, 0, 0)),       # x residual
        ],
        out_specs=pl.BlockSpec((1, c, n), lambda i, j: (i, 0, 0)),
        scratch_shapes=[pltpu.VMEM((c, m), jnp.float32)],
        compiler_params=pltpu.CompilerParams(
            dimension_semantics=("parallel", "arbitrary")),
        cost_estimate=pl.CostEstimate(
            flops=flops, transcendentals=b * m * m,
            bytes_accessed=bytes_accessed),
    )(theta_cm, phi_cm, g_cm, w_even, w_odd, x_flat)


# ---------------------------------------------------------------------------
# Full APNB forward
# ---------------------------------------------------------------------------

def apnb_forward(x, w_phi, w_theta, w_g, w_mask):
    b, c, h, w = x.shape
    inter = c // 2
    n = h * w
    m = (inter * n) // c  # == n // 2; matches the module's odd .view(b, c, -1)

    x_flat = x.reshape(b, c, n)

    tile_n = _pick_tile(n, CONV_TILE_N_TARGET)
    tile_j = _pick_tile(m, ATTN_TILE_J_TARGET)

    # Fused QKV 1x1 convs (x read from HBM once).
    w_qkv = jnp.concatenate([w_phi, w_theta, w_g], axis=0)        # (3*inter, C)
    phi, theta, g = qkv_conv1x1(w_qkv, x_flat, inter, tile_n)     # (b, inter, n)

    # The module's .view(b, c, -1): pure contiguous reshape, no transpose.
    phi_cm = phi.reshape(b, c, m)
    theta_cm = theta.reshape(b, c, m)
    g_cm = g.reshape(b, c, m)

    # conv_mask expressed against the (C, M) layout: row q of the (inter, N)
    # view is rows 2q (first N/2 spatial positions) and 2q+1 (last N/2) of the
    # (C, M) view, so expand w_mask into even/odd zero-interleaved columns.
    w_even = jnp.zeros((c, c), w_mask.dtype).at[:, 0::2].set(w_mask)
    w_odd = jnp.zeros((c, c), w_mask.dtype).at[:, 1::2].set(w_mask)

    out = apnb_attention_mask(theta_cm, phi_cm, g_cm, w_even, w_odd,
                              x_flat, tile_j)                     # (b, c, n)
    return out.reshape(b, c, h, w)


# ---------------------------------------------------------------------------
# Pure-JAX reference (mirrors the PyTorch forward exactly) for validation.
# ---------------------------------------------------------------------------

def apnb_reference(x, w_phi, w_theta, w_g, w_mask):
    b, c, h, w = x.shape
    inter = c // 2

    def conv(wt, xx):  # 1x1 conv, no bias, NCHW
        return jnp.einsum("oi,bihw->bohw", wt, xx)

    x_phi = conv(w_phi, x).reshape(b, c, -1)
    x_theta = conv(w_theta, x).reshape(b, c, -1).transpose(0, 2, 1)
    x_g = conv(w_g, x).reshape(b, c, -1).transpose(0, 2, 1)
    a = jnp.matmul(x_theta, x_phi)
    a = jax.nn.softmax(a, axis=1)
    y = jnp.matmul(a, x_g)
    y = y.transpose(0, 2, 1).reshape(b, inter, h, w)
    return conv(w_mask, y) + x


# ---------------------------------------------------------------------------
# Main
# ---------------------------------------------------------------------------

if __name__ == "__main__":
    key = jax.random.PRNGKey(0)
    b, c, h, w = 2, 4, 32, 32     # small, but large enough to exercise tiling
    inter = c // 2

    k1, k2, k3, k4, k5 = jax.random.split(key, 5)
    x = jax.random.normal(k1, (b, c, h, w), dtype=jnp.float32)
    # Conv2d weights of shape (out, in, 1, 1) -> stored squeezed as (out, in).
    w_phi = 0.1 * jax.random.normal(k2, (inter, c), dtype=jnp.float32)
    w_theta = 0.1 * jax.random.normal(k3, (inter, c), dtype=jnp.float32)
    w_g = 0.1 * jax.random.normal(k4, (inter, c), dtype=jnp.float32)
    w_mask = 0.1 * jax.random.normal(k5, (c, inter), dtype=jnp.float32)

    out = jax.block_until_ready(apnb_forward(x, w_phi, w_theta, w_g, w_mask))
    ref = apnb_reference(x, w_phi, w_theta, w_g, w_mask)

    assert out.shape == (b, c, h, w)
    # Tolerance slightly looser than pure-f32 because the kernel uses
    # pl.reciprocal(..., approx=True) for the softmax denominator (EUP path).
    assert jnp.allclose(out, ref, atol=2e-3, rtol=2e-3), "mismatch vs reference"

    print("KERNEL_OK")
</pallas_src>

<mosaic_0001>
module attributes {stable_mosaic.version = 11 : i64} {
  func.func @_qkv_kernel(%arg0: i32, %arg1: i32, %arg2: memref<6x4xf32, #tpu.memory_space<vmem>>, %arg3: memref<1x4x512xf32, #tpu.memory_space<vmem>>, %arg4: memref<1x2x512xf32, #tpu.memory_space<vmem>>, %arg5: memref<1x2x512xf32, #tpu.memory_space<vmem>>, %arg6: memref<1x2x512xf32, #tpu.memory_space<vmem>>) attributes {dimension_semantics = [#tpu.dimension_semantics<parallel>, #tpu.dimension_semantics<parallel>], iteration_bounds = array<i64: 2, 2>, scalar_prefetch = 0 : i64, scratch_operands = 0 : i64, tpu.core_type = #tpu.core_type<tc>, window_params = [{pipeline_mode = #tpu.pipeline_mode<synchronous>, transform_indices = @transform_0, window_bounds = array<i64: 6, 4>}, {transform_indices = @transform_1, window_bounds = array<i64: 1, 4, 512>}, {transform_indices = @transform_2, window_bounds = array<i64: 1, 2, 512>}, {transform_indices = @transform_3, window_bounds = array<i64: 1, 2, 512>}, {transform_indices = @transform_4, window_bounds = array<i64: 1, 2, 512>}]} {
    %c0 = arith.constant 0 : index
    %c0_0 = arith.constant 0 : index
    %c0_1 = arith.constant 0 : index
    %0 = vector.load %arg3[%c0, %c0_0, %c0_1] : memref<1x4x512xf32, #tpu.memory_space<vmem>>, vector<1x4x512xf32>
    %1 = vector.shape_cast %0 : vector<1x4x512xf32> to vector<4x512xf32>
    %c0_2 = arith.constant 0 : index
    %c0_3 = arith.constant 0 : index
    %2 = vector.load %arg2[%c0_2, %c0_3] : memref<6x4xf32, #tpu.memory_space<vmem>>, vector<6x4xf32>
    %cst = arith.constant dense<0.000000e+00> : vector<6x512xf32>
    %3 = tpu.matmul %2, %1, %cst {dimension_numbers = #tpu.dot_dimension_numbers<[1], [0], [0], [1], [0, 0, 1, 1], [], []>} : vector<6x4xf32>, vector<4x512xf32>, vector<6x512xf32> -> vector<6x512xf32>
    %4 = vector.extract_strided_slice %3 {offsets = [0, 0], sizes = [2, 512], strides = [1, 1]} : vector<6x512xf32> to vector<2x512xf32>
    %c0_4 = arith.constant 0 : index
    %c0_5 = arith.constant 0 : index
    %c0_6 = arith.constant 0 : index
    %5 = vector.load %arg4[%c0_4, %c0_5, %c0_6] : memref<1x2x512xf32, #tpu.memory_space<vmem>>, vector<1x2x512xf32>
    %6 = vector.shape_cast %5 : vector<1x2x512xf32> to vector<2x512xf32>
    %7 = vector.shape_cast %4 : vector<2x512xf32> to vector<1x2x512xf32>
    tpu.vector_store %arg4[%c0_4, %c0_5, %c0_6], %7 {strides = array<i32>} : memref<1x2x512xf32, #tpu.memory_space<vmem>>, vector<1x2x512xf32>,
    %8 = vector.extract_strided_slice %3 {offsets = [2, 0], sizes = [2, 512], strides = [1, 1]} : vector<6x512xf32> to vector<2x512xf32>
    %c0_7 = arith.constant 0 : index
    %c0_8 = arith.constant 0 : index
    %c0_9 = arith.constant 0 : index
    %9 = vector.load %arg5[%c0_7, %c0_8, %c0_9] : memref<1x2x512xf32, #tpu.memory_space<vmem>>, vector<1x2x512xf32>
    %10 = vector.shape_cast %9 : vector<1x2x512xf32> to vector<2x512xf32>
    %11 = vector.shape_cast %8 : vector<2x512xf32> to vector<1x2x512xf32>
    tpu.vector_store %arg5[%c0_7, %c0_8, %c0_9], %11 {strides = array<i32>} : memref<1x2x512xf32, #tpu.memory_space<vmem>>, vector<1x2x512xf32>,
    %12 = vector.extract_strided_slice %3 {offsets = [4, 0], sizes = [2, 512], strides = [1, 1]} : vector<6x512xf32> to vector<2x512xf32>
    %c0_10 = arith.constant 0 : index
    %c0_11 = arith.constant 0 : index
    %c0_12 = arith.constant 0 : index
    %13 = vector.load %arg6[%c0_10, %c0_11, %c0_12] : memref<1x2x512xf32, #tpu.memory_space<vmem>>, vector<1x2x512xf32>
    %14 = vector.shape_cast %13 : vector<1x2x512xf32> to vector<2x512xf32>
    %15 = vector.shape_cast %12 : vector<2x512xf32> to vector<1x2x512xf32>
    tpu.vector_store %arg6[%c0_10, %c0_11, %c0_12], %15 {strides = array<i32>} : memref<1x2x512xf32, #tpu.memory_space<vmem>>, vector<1x2x512xf32>,
    return
  }
  func.func @transform_0(%arg0: i32, %arg1: i32) -> (i32, i32) {
    %c0_i32 = arith.constant 0 : i32
    %c0_i32_0 = arith.constant 0 : i32
    %c0_i32_1 = arith.constant 0 : i32
    return %c0_i32, %c0_i32_0 : i32, i32
  }
  func.func @transform_1(%arg0: i32, %arg1: i32) -> (i32, i32, i32) {
    %c0_i32 = arith.constant 0 : i32
    %c0_i32_0 = arith.constant 0 : i32
    return %arg0, %c0_i32, %arg1 : i32, i32, i32
  }
  func.func @transform_2(%arg0: i32, %arg1: i32) -> (i32, i32, i32) {
    %c0_i32 = arith.constant 0 : i32
    %c0_i32_0 = arith.constant 0 : i32
    return %arg0, %c0_i32, %arg1 : i32, i32, i32
  }
  func.func @transform_3(%arg0: i32, %arg1: i32) -> (i32, i32, i32) {
    %c0_i32 = arith.constant 0 : i32
    %c0_i32_0 = arith.constant 0 : i32
    return %arg0, %c0_i32, %arg1 : i32, i32, i32
  }
  func.func @transform_4(%arg0: i32, %arg1: i32) -> (i32, i32, i32) {
    %c0_i32 = arith.constant 0 : i32
    %c0_i32_0 = arith.constant 0 : i32
    return %arg0, %c0_i32, %arg1 : i32, i32, i32
  }
}

</mosaic_0001>

<llo_original>
// kernel: tpu_custom_call.1
$region0: #{tpu_custom_call.1}
  #allocation0 [shape = 'u32[]', space=smem, size = 0x4, offset = 0x4, fixed_abs, tag = 'smem constant byte address 0x4 - core index']
  #allocation1 [shape = 'u32[144,128]{1,0:T(1,128)}', space=vmem, size = 0x12000, scoped, tag = 'internal scratch']
  %s0 = inlined_call_operand.vmem [shape: f32[6,4], index: 0, kind: input, shape index: {}]
  %s1 = inlined_call_operand.hbm [shape: f32[2,4,1024], index: 1, kind: input, shape index: {}]
  %s2 = inlined_call_operand.hbm [shape: f32[2,2,1024], index: 2, kind: output, shape index: {0}]
  %s3 = inlined_call_operand.hbm [shape: f32[2,2,1024], index: 3, kind: output, shape index: {1}]
  %s4 = inlined_call_operand.hbm [shape: f32[2,2,1024], index: 4, kind: output, shape index: {2}]
  %5 = xla_tuple %s2, %s3, %s4
  %s6 = sld [smem:[#allocation0]]
  $region61: #{tpu_custom_call.1} parent=0
    _
  %s8 = ssub.s32 1, %s6
  %s9 = scalar_select 0, %s8, %s6
  $region1: #{tpu_custom_call.1} parent=0
    #allocation2 [shape = 'u8[16384]{0}', space=vmem, size = 0x4000, scoped, tag = 'input window, operand 1']
    #allocation3 [shape = 's32[2]{0}', space=sflag, size = 0x8, scoped, tag = 'scoped memory for tpu_custom_call.1']
    #allocation4 [shape = 's32[2]{0}', space=sflag, size = 0x8, scoped, tag = 'scoped memory for tpu_custom_call.1']
    #allocation5 [shape = 'u8[8192]{0}', space=vmem, size = 0x2000, scoped, tag = 'output window, operand 0']
    #allocation6 [shape = 'u8[8192]{0}', space=vmem, size = 0x2000, scoped, tag = 'output window, operand 1']
    #allocation7 [shape = 's32[2]{0}', space=sflag, size = 0x8, scoped, tag = 'scoped memory for tpu_custom_call.1']
    #allocation8 [shape = 'u8[8192]{0}', space=vmem, size = 0x2000, scoped, tag = 'output window, operand 2']
    %10 = vsyncpa [#allocation3], 0
    %s11 = scalar_lea.sflag [#allocation3], 1
    %12 = vsyncpa %s11, 0
    %13 = vsyncpa [#allocation4], 0
    %s14 = scalar_lea.sflag [#allocation4], 1
    %15 = vsyncpa %s14, 0
    %16 = vsyncpa [#allocation7], 0
    %s17 = scalar_lea.sflag [#allocation7], 1
    %18 = vsyncpa %s17, 0
    loop: start=0, step=1, limit=6
    $region2: #{tpu_custom_call.1} parent=1 // loop_pre_header
      _
    $region3: #{tpu_custom_call.1} parent=1 // loop_header
      %s20 = sphi 0, %s24
      %p21 = scmp.ge.s32.totalorder %s20, 6
      %s27 = sphi 0, %s39
      %s28 = sphi 0, %s35
      %s29 = sphi 0, %s27
      %s30 = sphi 0, %s28
      %s31 = sphi 0, %s29
      %s32 = sphi 0, %s30
      %s40 = sphi 0, %s40
      %s42 = sphi 0, %s40
      %s43 = sphi 0, %s42
      %s57 = sphi 0, %s43
      %s65 = sphi 0, %s67
      %s68 = sphi 0, %s65
      %s69 = sphi 0, %s68
      %s85 = sphi 0, %s69
      %s93 = sphi 0, %s95
      %s96 = sphi 0, %s93
      %s97 = sphi 0, %s96
      %s113 = sphi 0, %s97
      %s121 = sphi 0, %s123
      %s124 = sphi 0, %s121
      %s125 = sphi 0, %s124
      %s141 = sphi 0, %s125
      %s149 = sphi 0, %s151
      %s152 = sphi 0, %s149
      %s153 = sphi 0, %s152
      %s169 = sphi 0, %s153
    $region4: #{tpu_custom_call.1} parent=1 // loop_header_branch
      %23 = sbr.rel (%p21) target = $region8
    $region5: #{tpu_custom_call.1} parent=1 // loop_body
      %s25 = ssub.s32 %s20, 1
      %s26 = ssub.s32 %s20, 2
      %s33 = sadd.s32 1, %s28
      %p34 = scmp.ge.s32.totalorder %s33, 2
      %s35 = scalar_select %p34, 0, %s33
      %s36 = sadd.s32 1, %s27
      %s37 = scalar_select %p34, %s36, %s27
      %p38 = scmp.ge.s32.totalorder %s37, 2
      %s39 = scalar_select %p38, 0, %s37
      %s41 = sadd.s32 %s40, 1
      %p44 = scmp.eq.s32.totalorder %s20, 3
      %p45 = scmp.ne.s32.totalorder %s40, %s42
      %p46 = scmp.eq.s32.totalorder %s20, 0
      %p47 = por %p45, %p46
      %p48 = scmp.ne.s32.totalorder %s40, %s42
      %p49 = scmp.eq.s32.totalorder %s25, 3
      %p50 = por %p48, %p49
      %p51 = scmp.ne.s32.totalorder %s42, %s43
      %p52 = scmp.eq.s32.totalorder %s25, 0
      %p53 = por %p51, %p52
      %p54 = scmp.ne.s32.totalorder %s42, %s43
      %p55 = scmp.eq.s32.totalorder %s26, 3
      %p56 = por %p54, %p55
      %p58 = scmp.ne.s32.totalorder %s43, %s57
      %p59 = scmp.eq.s32.totalorder %s26, 0
      %p60 = por %p58, %p59
      %s61 = ssub.s32 %s27, %s39
      %s62 = ssub.s32 %s28, %s35
      %s63 = sor.u32 %s61, %s62
      %p64 = scmp.eq.s32.totalorder %s63, 0
      %s66 = sadd.s32 %s65, 1
      %s67 = scalar_select %p64, %s65, %s66
      %p70 = pneg %p64
      %p71 = scmp.eq.s32.totalorder %s20, 3
      %p72 = por %p70, %p71
      %p73 = scmp.ne.s32.totalorder %s65, %s68
      %p74 = scmp.eq.s32.totalorder %s20, 0
      %p75 = por %p73, %p74
      %p76 = scmp.ne.s32.totalorder %s65, %s68
      %p77 = scmp.eq.s32.totalorder %s25, 3
      %p78 = por %p76, %p77
      %p79 = scmp.ne.s32.totalorder %s68, %s69
      %p80 = scmp.eq.s32.totalorder %s25, 0
      %p81 = por %p79, %p80
      %p82 = scmp.ne.s32.totalorder %s68, %s69
      %p83 = scmp.eq.s32.totalorder %s26, 3
      %p84 = por %p82, %p83
      %p86 = scmp.ne.s32.totalorder %s69, %s85
      %p87 = scmp.eq.s32.totalorder %s26, 0
      %p88 = por %p86, %p87
      %s89 = ssub.s32 %s27, %s39
      %s90 = ssub.s32 %s28, %s35
      %s91 = sor.u32 %s89, %s90
      %p92 = scmp.eq.s32.totalorder %s91, 0
      %s94 = sadd.s32 %s93, 1
      %s95 = scalar_select %p92, %s93, %s94
      %p98 = pneg %p92
      %p99 = scmp.eq.s32.totalorder %s20, 3
      %p100 = por %p98, %p99
      %p101 = scmp.ne.s32.totalorder %s93, %s96
      %p102 = scmp.eq.s32.totalorder %s20, 0
      %p103 = por %p101, %p102
      %p104 = scmp.ne.s32.totalorder %s93, %s96
      %p105 = scmp.eq.s32.totalorder %s25, 3
      %p106 = por %p104, %p105
      %p107 = scmp.ne.s32.totalorder %s96, %s97
      %p108 = scmp.eq.s32.totalorder %s25, 0
      %p109 = por %p107, %p108
      %p110 = scmp.ne.s32.totalorder %s96, %s97
      %p111 = scmp.eq.s32.totalorder %s26, 3
      %p112 = por %p110, %p111
      %p114 = scmp.ne.s32.totalorder %s97, %s113
      %p115 = scmp.eq.s32.totalorder %s26, 0
      %p116 = por %p114, %p115
      %s117 = ssub.s32 %s27, %s39
      %s118 = ssub.s32 %s28, %s35
      %s119 = sor.u32 %s117, %s118
      %p120 = scmp.eq.s32.totalorder %s119, 0
      %s122 = sadd.s32 %s121, 1
      %s123 = scalar_select %p120, %s121, %s122
      %p126 = pneg %p120
      %p127 = scmp.eq.s32.totalorder %s20, 3
      %p128 = por %p126, %p127
      %p129 = scmp.ne.s32.totalorder %s121, %s124
      %p130 = scmp.eq.s32.totalorder %s20, 0
      %p131 = por %p129, %p130
      %p132 = scmp.ne.s32.totalorder %s121, %s124
      %p133 = scmp.eq.s32.totalorder %s25, 3
      %p134 = por %p132, %p133
      %p135 = scmp.ne.s32.totalorder %s124, %s125
      %p136 = scmp.eq.s32.totalorder %s25, 0
      %p137 = por %p135, %p136
      %p138 = scmp.ne.s32.totalorder %s124, %s125
      %p139 = scmp.eq.s32.totalorder %s26, 3
      %p140 = por %p138, %p139
      %p142 = scmp.ne.s32.totalorder %s125, %s141
      %p143 = scmp.eq.s32.totalorder %s26, 0
      %p144 = por %p142, %p143
      %s145 = ssub.s32 %s27, %s39
      %s146 = ssub.s32 %s28, %s35
      %s147 = sor.u32 %s145, %s146
      %p148 = scmp.eq.s32.totalorder %s147, 0
      %s150 = sadd.s32 %s149, 1
      %s151 = scalar_select %p148, %s149, %s150
      %p154 = pneg %p148
      %p155 = scmp.eq.s32.totalorder %s20, 3
      %p156 = por %p154, %p155
      %p157 = scmp.ne.s32.totalorder %s149, %s152
      %p158 = scmp.eq.s32.totalorder %s20, 0
      %p159 = por %p157, %p158
      %p160 = scmp.ne.s32.totalorder %s149, %s152
      %p161 = scmp.eq.s32.totalorder %s25, 3
      %p162 = por %p160, %p161
      %p163 = scmp.ne.s32.totalorder %s152, %s153
      %p164 = scmp.eq.s32.totalorder %s25, 0
      %p165 = por %p163, %p164
      %p166 = scmp.ne.s32.totalorder %s152, %s153
      %p167 = scmp.eq.s32.totalorder %s26, 3
      %p168 = por %p166, %p167
      %p170 = scmp.ne.s32.totalorder %s153, %s169
      %p171 = scmp.eq.s32.totalorder %s26, 0
      %p172 = por %p170, %p171
      %p173 = scmp.le.s32.totalorder 1, %s20
      %p174 = scmp.lt.s32.totalorder %s20, 5
      %p175 = pnand %p173, %p174
      %p176 = pneg %p175
      // Predicated region
      $region9: #{tpu_custom_call.1} parent=5 // pred_check
        _
      $region10: #{tpu_custom_call.1} parent=5 // pred_check_branch
        %178 = sbr.rel (%p175) target = $region12
      $region11: #{tpu_custom_call.1} parent=5 // pred_region
        %s179 = ssub.s32 %s20, 1
        // Predicated region
        $region13: #{tpu_custom_call.1} parent=11 // pred_check
          %p180 = pneg %p53
        $region14: #{tpu_custom_call.1} parent=11 // pred_check_branch
          %182 = sbr.rel (%p180) target = $region16
        $region15: #{tpu_custom_call.1} parent=11 // pred_region
          _
        $region16: #{tpu_custom_call.1} parent=11 // pred_fallthru
          _
      $region12: #{tpu_custom_call.1} parent=5 // pred_fallthru
        _
      %p183 = scmp.lt.s32.totalorder %s20, 4
      // Predicated region
      $region17: #{tpu_custom_call.1} parent=5 // pred_check
        %p184 = pneg %p183
      $region18: #{tpu_custom_call.1} parent=5 // pred_check_branch
        %186 = sbr.rel (%p184) target = $region20
      $region19: #{tpu_custom_call.1} parent=5 // pred_region
        // Predicated region
        $region21: #{tpu_custom_call.1} parent=19 // pred_check
          %p187 = pneg %p75
        $region22: #{tpu_custom_call.1} parent=19 // pred_check_branch
          %189 = sbr.rel (%p187) target = $region24
        $region23: #{tpu_custom_call.1} parent=19 // pred_region
          %s190 = sand.u32 %s65, 1
          %s191 = scalar_lea.sflag [#allocation3], %s190
          %s192 = sand.u32 %s65, 1
          %s193 = smul.addr %s192, 16
          %s194 = scalar_lea.vmem [#allocation2], %s193
          %s195 = smul.u32 4, %s28
          %s197 = ssub.s32 256, 256
          %198 = vsyncadd %s191, %s197
          %s199 = smul.addr %s27, 8
          %s200 = sadd.s32 %s195, %s199
          %s201 = smul.addr %s200, 64
          %s202 = scalar_lea.hbm %s1, %s201
          %s204 = sshll.u32 %s194, 4
          %s205 = int_to_ptr.vmem [resolvable:$true] %s204
          %207 = dma.hbm_to_vmem [thread:$0]  %s202, 256, %s205, %s191
        $region24: #{tpu_custom_call.1} parent=19 // pred_fallthru
          _
      $region20: #{tpu_custom_call.1} parent=5 // pred_fallthru
        _
      %p208 = scmp.le.s32.totalorder 1, %s20
      %p209 = scmp.lt.s32.totalorder %s20, 5
      %p210 = pnand %p208, %p209
      %p211 = pneg %p210
      // Predicated region
      $region25: #{tpu_custom_call.1} parent=5 // pred_check
        _
      $region26: #{tpu_custom_call.1} parent=5 // pred_check_branch
        %213 = sbr.rel (%p210) target = $region28
      $region27: #{tpu_custom_call.1} parent=5 // pred_region
        %s214 = ssub.s32 %s20, 1
        %s215 = sand.u32 %s68, 1
        %s216 = scalar_lea.sflag [#allocation3], %s215
        %s217 = sand.u32 %s68, 1
        %s218 = smul.addr %s217, 16
        %s219 = scalar_lea.vmem [#allocation2], %s218
        // Predicated region
        $region29: #{tpu_custom_call.1} parent=27 // pred_check
          %p220 = pneg %p81
        $region30: #{tpu_custom_call.1} parent=27 // pred_check_branch
          %222 = sbr.rel (%p220) target = $region32
        $region31: #{tpu_custom_call.1} parent=27 // pred_region
          %223 = dma.done %s216, 256
        $region32: #{tpu_custom_call.1} parent=27 // pred_fallthru
          _
        %p224 = pneg %p53
        %p225 = pneg %p50
        %s226 = sand.u32 %s68, 1
        %s227 = scalar_lea.sflag [#allocation3], %s226
        %s228 = sand.u32 %s68, 1
        %s229 = smul.addr %s228, 16
        %s230 = scalar_lea.vmem [#allocation2], %s229
        %p231 = pneg %p81
        %p232 = pneg %p78
        %p233 = pneg %p109
        %p234 = pneg %p106
        %s235 = sand.u32 %s96, 1
        %s236 = scalar_lea.sflag [#allocation4], %s235
        %s237 = sand.u32 %s96, 1
        %s238 = smul.addr %s237, 8
        %s239 = scalar_lea.vmem [#allocation5], %s238
        %p240 = pneg %p137
        %p241 = pneg %p134
        %s242 = sand.u32 %s25, 1
        %s243 = scalar_lea.sflag [#allocation7], %s242
        %s244 = sand.u32 %s124, 1
        %s245 = smul.addr %s244, 8
        %s246 = scalar_lea.vmem [#allocation6], %s245
        %p247 = pneg %p165
        %p248 = pneg %p162
        %s249 = sand.u32 %s25, 1
        %s250 = scalar_lea.sflag [#allocation7], %s249
        %s251 = sand.u32 %s152, 1
        %s252 = smul.addr %s251, 8
        %s253 = scalar_lea.vmem [#allocation8], %s252
        %s254 = smul.u32 4, %s30
        %s255 = smul.u32 4, %s30
        %s256 = smul.u32 4, %s30
        %s257 = smul.u32 4, %s30
        %v258 = vld [vmem:[%s219] sm:$0xff]
        %v259 = vld [vmem:[%s219 + $0x8] sm:$0xff]
        %v260 = vld [vmem:[%s0] sm:$0x3f]
        %v263 = vcombine.high %v258, %v258
        %v264 = vcombine.high %v259, %v259
        %vm265 = vcmask 31744
        %v267 = vsel %vm265, %v260, 0
        %vm269 = vcmask 1043456
        %v270 = vsel %vm269, %v258, 0
        %v272 = vsel %vm269, %v263, 0
        %v274 = vsel %vm269, %v259, 0
        %v276 = vsel %vm269, %v264, 0
        %278 = vmatprep.subr.mxu0 0.0
        %279 = vmatpush1.msra.mxu0 0.0
        %280 = vmatprep.subr.mxu0 0.0
        %281 = vmatpush1.msra.mxu0 0.0
        %282 = vmatprep.subr.mxu0 0.0
        %283 = vmatpush1.msra.mxu0 0.0
        %284 = vmatprep.subr.mxu0 0.0
        %285 = vmatpush1.msra.mxu0 0.0
        %286 = vmatprep.subr.mxu0 0.0
        %287 = vmatpush1.msra.mxu0 0.0
        %288 = vmatprep.subr.mxu0 0.0
        %289 = vmatpush1.msra.mxu0 0.0
        %290 = vmatprep.subr.mxu0 0.0
        %291 = vmatpush1.msra.mxu0 0.0
        %292 = vmatprep.subr.mxu0 0.0
        %293 = vmatpush1.msra.mxu0 0.0
        %294 = vmatprep.subr.mxu0 0.0
        %295 = vmatpush1.msra.mxu0 0.0
        %296 = vmatprep.subr.mxu0 0.0
        %297 = vmatpush1.msra.mxu0 0.0
        %298 = vmatprep.subr.mxu0 0.0
        %299 = vmatpush1.msra.mxu0 0.0
        %300 = vmatprep.subr.mxu0 0.0
        %301 = vmatpush1.msra.mxu0 0.0
        %302 = vmatprep.subr.mxu0 0.0
        %303 = vmatpush1.msra.mxu0 0.0
        %304 = vmatprep.subr.mxu0 0.0
        %305 = vmatpush1.msra.mxu0 0.0
        %306 = vmatprep.subr.mxu0 0.0
        %307 = vmatpush1.msra.mxu0 0.0
        %308 = vmatprep.subr.mxu0 %v272
        %309 = vmatpush1.msra.mxu0 %v270
        %310 = vmatprep.subr.mxu0 0.0
        %311 = vmatpush2.msra.mxu0 0.0
        %312 = vmatprep.subr.mxu0 0.0
        %313 = vmatpush2.msra.mxu0 0.0
        %314 = vmatprep.subr.mxu0 0.0
        %315 = vmatpush2.msra.mxu0 0.0
        %316 = vmatprep.subr.mxu0 0.0
        %317 = vmatpush2.msra.mxu0 0.0
        %318 = vmatprep.subr.mxu0 0.0
        %319 = vmatpush2.msra.mxu0 0.0
        %320 = vmatprep.subr.mxu0 0.0
        %321 = vmatpush2.msra.mxu0 0.0
        %322 = vmatprep.subr.mxu0 0.0
        %323 = vmatpush2.msra.mxu0 0.0
        %324 = vmatprep.subr.mxu0 0.0
        %325 = vmatpush2.msra.mxu0 0.0
        %326 = vmatprep.subr.mxu0 0.0
        %327 = vmatpush2.msra.mxu0 0.0
        %328 = vmatprep.subr.mxu0 0.0
        %329 = vmatpush2.msra.mxu0 0.0
        %330 = vmatprep.subr.mxu0 0.0
        %331 = vmatpush2.msra.mxu0 0.0
        %332 = vmatprep.subr.mxu0 0.0
        %333 = vmatpush2.msra.mxu0 0.0
        %334 = vmatprep.subr.mxu0 0.0
        %335 = vmatpush2.msra.mxu0 0.0
        %336 = vmatprep.subr.mxu0 0.0
        %337 = vmatpush2.msra.mxu0 0.0
        %338 = vmatprep.subr.mxu0 0.0
        %339 = vmatpush2.msra.mxu0 0.0
        %340 = vmatprep.subr.mxu0 0.0
        %341 = vmatpush2.msra.mxu0 0.0
        %342 = vmatprep.mubr.f32.mxu0 0.0
        %343 = vmatmul.mubr.f32.gmra.mxu0 %v267
        %v344 = vpop.f32.mrf.mxu0
        %v345 = vadd.f32 0.0, %v344
        %v346 = vpop.f32.mrf.mxu0
        %v347 = vadd.f32 0.0, %v346
        %348 = vdwg.mxu0
        %349 = vmatprep.subr.mxu0 0.0
        %350 = vmatpush1.msra.mxu0 0.0
        %351 = vmatprep.subr.mxu0 0.0
        %352 = vmatpush1.msra.mxu0 0.0
        %353 = vmatprep.subr.mxu0 0.0
        %354 = vmatpush1.msra.mxu0 0.0
        %355 = vmatprep.subr.mxu0 0.0
        %356 = vmatpush1.msra.mxu0 0.0
        %357 = vmatprep.subr.mxu0 0.0
        %358 = vmatpush1.msra.mxu0 0.0
        %359 = vmatprep.subr.mxu0 0.0
        %360 = vmatpush1.msra.mxu0 0.0
        %361 = vmatprep.subr.mxu0 0.0
        %362 = vmatpush1.msra.mxu0 0.0
        %363 = vmatprep.subr.mxu0 0.0
        %364 = vmatpush1.msra.mxu0 0.0
        %365 = vmatprep.subr.mxu0 0.0
        %366 = vmatpush1.msra.mxu0 0.0
        %367 = vmatprep.subr.mxu0 0.0
        %368 = vmatpush1.msra.mxu0 0.0
        %369 = vmatprep.subr.mxu0 0.0
        %370 = vmatpush1.msra.mxu0 0.0
        %371 = vmatprep.subr.mxu0 0.0
        %372 = vmatpush1.msra.mxu0 0.0
        %373 = vmatprep.subr.mxu0 0.0
        %374 = vmatpush1.msra.mxu0 0.0
        %375 = vmatprep.subr.mxu0 0.0
        %376 = vmatpush1.msra.mxu0 0.0
        %377 = vmatprep.subr.mxu0 0.0
        %378 = vmatpush1.msra.mxu0 0.0
        %379 = vmatprep.subr.mxu0 %v276
        %380 = vmatpush1.msra.mxu0 %v274
        %381 = vmatprep.subr.mxu0 0.0
        %382 = vmatpush2.msra.mxu0 0.0
        %383 = vmatprep.subr.mxu0 0.0
        %384 = vmatpush2.msra.mxu0 0.0
        %385 = vmatprep.subr.mxu0 0.0
        %386 = vmatpush2.msra.mxu0 0.0
        %387 = vmatprep.subr.mxu0 0.0
        %388 = vmatpush2.msra.mxu0 0.0
        %389 = vmatprep.subr.mxu0 0.0
        %390 = vmatpush2.msra.mxu0 0.0
        %391 = vmatprep.subr.mxu0 0.0
        %392 = vmatpush2.msra.mxu0 0.0
        %393 = vmatprep.subr.mxu0 0.0
        %394 = vmatpush2.msra.mxu0 0.0
        %395 = vmatprep.subr.mxu0 0.0
        %396 = vmatpush2.msra.mxu0 0.0
        %397 = vmatprep.subr.mxu0 0.0
        %398 = vmatpush2.msra.mxu0 0.0
        %399 = vmatprep.subr.mxu0 0.0
        %400 = vmatpush2.msra.mxu0 0.0
        %401 = vmatprep.subr.mxu0 0.0
        %402 = vmatpush2.msra.mxu0 0.0
        %403 = vmatprep.subr.mxu0 0.0
        %404 = vmatpush2.msra.mxu0 0.0
        %405 = vmatprep.subr.mxu0 0.0
        %406 = vmatpush2.msra.mxu0 0.0
        %407 = vmatprep.subr.mxu0 0.0
        %408 = vmatpush2.msra.mxu0 0.0
        %409 = vmatprep.subr.mxu0 0.0
        %410 = vmatpush2.msra.mxu0 0.0
        %411 = vmatprep.subr.mxu0 0.0
        %412 = vmatpush2.msra.mxu0 0.0
        %413 = vmatprep.mubr.f32.mxu0 0.0
        %414 = vmatmul.mubr.f32.gmra.mxu0 %v267
        %v415 = vpop.f32.mrf.mxu0
        %v416 = vadd.f32 0.0, %v415
        %v417 = vpop.f32.mrf.mxu0
        %v418 = vadd.f32 0.0, %v417
        %419 = vdwg.mxu0
        %v424 = vcombine.low %v345, %v347
        %v425 = vcombine.low %v416, %v418
        %v427 = vunpack.c.l.s4 1983009808
        %v428 = vunpack.c.0.s8 %v427
        %v429 = vlaneseq
        %v430 = vshrl.u32 %v429, 7
        %v431 = vsub.s32 %v428, %v430
        %v432 = vrot.slane %v424, %v431
        %v434 = vunpack.c.l.s4 1983009808
        %v435 = vunpack.c.0.s8 %v434
        %v436 = vlaneseq
        %v437 = vshrl.u32 %v436, 7
        %v438 = vsub.s32 %v435, %v437
        %v439 = vrot.slane %v425, %v438
        %v440 = vcombine.low %v432, %v439
        %442 = vst [vmem:[%s239] sm:$0xff] %v440
        %v443 = vcombine.high %v432, %v439
        %445 = vst [vmem:[%s246] sm:$0xff] %v443
        %v446 = vcombine.high %v345, %v347
        %v447 = vcombine.high %v416, %v418
        %v449 = vunpack.c.l.s4 1983009808
        %v450 = vunpack.c.0.s8 %v449
        %v451 = vlaneseq
        %v452 = vshrl.u32 %v451, 7
        %v453 = vsub.s32 %v450, %v452
        %v454 = vrot.slane %v446, %v453
        %v456 = vunpack.c.l.s4 1983009808
        %v457 = vunpack.c.0.s8 %v456
        %v458 = vlaneseq
        %v459 = vshrl.u32 %v458, 7
        %v460 = vsub.s32 %v457, %v459
        %v461 = vrot.slane %v447, %v460
        %v462 = vcombine.low %v454, %v461
        %464 = vst [vmem:[%s253] sm:$0xff] %v462
        %s465 = sand.u32 %s96, 1
        %s466 = scalar_lea.sflag [#allocation4], %s465
        %s467 = sand.u32 %s96, 1
        %s468 = smul.addr %s467, 8
        %s469 = scalar_lea.vmem [#allocation5], %s468
        %s470 = sand.u32 %s25, 1
        %s471 = scalar_lea.sflag [#allocation7], %s470
        %s472 = sand.u32 %s124, 1
        %s473 = smul.addr %s472, 8
        %s474 = scalar_lea.vmem [#allocation6], %s473
        %s475 = sand.u32 %s25, 1
        %s476 = scalar_lea.sflag [#allocation7], %s475
        %s477 = sand.u32 %s152, 1
        %s478 = smul.addr %s477, 8
        %s479 = scalar_lea.vmem [#allocation8], %s478
        // Predicated region
        $region33: #{tpu_custom_call.1} parent=27 // pred_check
          %p480 = pneg %p106
        $region34: #{tpu_custom_call.1} parent=27 // pred_check_branch
          %482 = sbr.rel (%p480) target = $region36
        $region35: #{tpu_custom_call.1} parent=27 // pred_region
          %s483 = smul.u32 4, %s30
          %s485 = ssub.s32 128, 128
          %486 = vsyncadd %s466, %s485
          %s487 = smul.addr %s29, 8
          %s488 = sadd.s32 %s483, %s487
          %s489 = smul.addr %s488, 32
          %s490 = scalar_lea.hbm %s2, %s489
          %s492 = sshll.u32 %s469, 4
          %s493 = int_to_ptr.vmem [resolvable:$true] %s492
          %495 = dma.vmem_to_hbm [thread:$0]  %s493, 128, %s490, %s466
        $region36: #{tpu_custom_call.1} parent=27 // pred_fallthru
          _
        // Predicated region
        $region37: #{tpu_custom_call.1} parent=27 // pred_check
          %p496 = pneg %p134
        $region38: #{tpu_custom_call.1} parent=27 // pred_check_branch
          %498 = sbr.rel (%p496) target = $region40
        $region39: #{tpu_custom_call.1} parent=27 // pred_region
          %s499 = smul.u32 4, %s30
          %s501 = ssub.s32 128, 128
          %502 = vsyncadd %s471, %s501
          %s503 = smul.addr %s29, 8
          %s504 = sadd.s32 %s499, %s503
          %s505 = smul.addr %s504, 32
          %s506 = scalar_lea.hbm %s3, %s505
          %s508 = sshll.u32 %s474, 4
          %s509 = int_to_ptr.vmem [resolvable:$true] %s508
          %511 = dma.vmem_to_hbm [thread:$0]  %s509, 128, %s506, %s471
        $region40: #{tpu_custom_call.1} parent=27 // pred_fallthru
          _
        // Predicated region
        $region41: #{tpu_custom_call.1} parent=27 // pred_check
          %p512 = pneg %p162
        $region42: #{tpu_custom_call.1} parent=27 // pred_check_branch
          %514 = sbr.rel (%p512) target = $region44
        $region43: #{tpu_custom_call.1} parent=27 // pred_region
          %s515 = smul.u32 4, %s30
          %s517 = ssub.s32 128, 128
          %518 = vsyncadd %s476, %s517
          %s519 = smul.addr %s29, 8
          %s520 = sadd.s32 %s515, %s519
          %s521 = smul.addr %s520, 32
          %s522 = scalar_lea.hbm %s4, %s521
          %s524 = sshll.u32 %s479, 4
          %s525 = int_to_ptr.vmem [resolvable:$true] %s524
          %527 = dma.vmem_to_hbm [thread:$0]  %s525, 128, %s522, %s476
        $region44: #{tpu_custom_call.1} parent=27 // pred_fallthru
          _
      $region28: #{tpu_custom_call.1} parent=5 // pred_fallthru
        _
      %p528 = scmp.le.s32.totalorder 2, %s20
      // Predicated region
      $region45: #{tpu_custom_call.1} parent=5 // pred_check
        %p529 = pneg %p528
      $region46: #{tpu_custom_call.1} parent=5 // pred_check_branch
        %531 = sbr.rel (%p529) target = $region48
      $region47: #{tpu_custom_call.1} parent=5 // pred_region
        %s532 = ssub.s32 %s20, 2
        // Predicated region
        $region49: #{tpu_custom_call.1} parent=47 // pred_check
          %p533 = pneg %p112
        $region50: #{tpu_custom_call.1} parent=47 // pred_check_branch
          %535 = sbr.rel (%p533) target = $region52
        $region51: #{tpu_custom_call.1} parent=47 // pred_region
          %s536 = sand.u32 %s97, 1
          %s537 = scalar_lea.sflag [#allocation4], %s536
          %s538 = sand.u32 %s97, 1
          %s539 = smul.addr %s538, 8
          %s540 = scalar_lea.vmem [#allocation5], %s539
          %541 = dma.done %s537, 128
        $region52: #{tpu_custom_call.1} parent=47 // pred_fallthru
          _
        // Predicated region
        $region53: #{tpu_custom_call.1} parent=47 // pred_check
          %p542 = pneg %p140
        $region54: #{tpu_custom_call.1} parent=47 // pred_check_branch
          %544 = sbr.rel (%p542) target = $region56
        $region55: #{tpu_custom_call.1} parent=47 // pred_region
          %s545 = sand.u32 %s26, 1
          %s546 = scalar_lea.sflag [#allocation7], %s545
          %s547 = sand.u32 %s125, 1
          %s548 = smul.addr %s547, 8
          %s549 = scalar_lea.vmem [#allocation6], %s548
          %550 = dma.done %s546, 128
        $region56: #{tpu_custom_call.1} parent=47 // pred_fallthru
          _
        // Predicated region
        $region57: #{tpu_custom_call.1} parent=47 // pred_check
          %p551 = pneg %p168
        $region58: #{tpu_custom_call.1} parent=47 // pred_check_branch
          %553 = sbr.rel (%p551) target = $region60
        $region59: #{tpu_custom_call.1} parent=47 // pred_region
          %s554 = sand.u32 %s26, 1
          %s555 = scalar_lea.sflag [#allocation7], %s554
          %s556 = sand.u32 %s153, 1
          %s557 = smul.addr %s556, 8
          %s558 = scalar_lea.vmem [#allocation8], %s557
          %559 = dma.done %s555, 128
        $region60: #{tpu_custom_call.1} parent=47 // pred_fallthru
          _
      $region48: #{tpu_custom_call.1} parent=5 // pred_fallthru
        _
    $region6: #{tpu_custom_call.1} parent=1 // loop_footer
      %s24 = sadd.s32 1, %s20
    $region7: #{tpu_custom_call.1} parent=1 // loop_footer_branch
      %19 = sbr.rel target = $region3
    $region8: #{tpu_custom_call.1} parent=1 // loop_exit
      _
    %560 = vsyncpa [#allocation3], 1
    %s561 = scalar_lea.sflag [#allocation3], 1
    %562 = vsyncpa %s561, 1
    %563 = vsyncpa [#allocation4], 1
    %s564 = scalar_lea.sflag [#allocation4], 1
    %565 = vsyncpa %s564, 1
    %566 = vsyncpa [#allocation7], 1
    %s567 = scalar_lea.sflag [#allocation7], 1
    %568 = vsyncpa %s567, 1

</llo_original>
